<compile_context>
chip_gen: v7x
topology: tpu7x:2x2x1
jax: 0.10.0
libtpu: 0.0.40
codegen_flags: <defaults>
</compile_context>

<pallas_src>
import jax
import jax.numpy as jnp
from jax.experimental import pallas as pl
from jax.experimental.pallas import tpu as pltpu


def _round_up(x, m):
    return ((x + m - 1) // m) * m


def _nbytes(a):
    return int(a.size) * a.dtype.itemsize


def classif_kernel(x_ref, w1_ref, b1_ref, w2_ref, b2_ref, w3_ref, b3_ref,
                   o_ref):
    # ---- lin1 + relu (bf16 MXU matmul, f32 accumulate) ----
    h1 = jnp.dot(x_ref[...], w1_ref[...], preferred_element_type=jnp.float32)
    h1 = jnp.maximum(h1 + b1_ref[...], 0.0)
    # ---- lin2 + relu ----
    h2 = jnp.dot(h1.astype(w2_ref.dtype), w2_ref[...],
                 preferred_element_type=jnp.float32)
    h2 = jnp.maximum(h2 + b2_ref[...], 0.0)
    # ---- lin3 (real class columns only; no padding / masking needed) ----
    logits = jnp.dot(h2.astype(w3_ref.dtype), w3_ref[...],
                     preferred_element_type=jnp.float32)
    logits = logits + b3_ref[...]
    # ---- log_softmax over the class axis (dim=1 in the PyTorch module) ----
    m = jnp.max(logits, axis=-1, keepdims=True)
    shifted = logits - m
    lse = jnp.log(jnp.sum(jnp.exp(shifted), axis=-1, keepdims=True))
    o_ref[...] = (shifted - lse).astype(o_ref.dtype)


def classif_net_forward(x, w1, b1, w2, b2, w3, b3, *, num_batch_tiles=1,
                        max_block_b=4096):
    """Fused ClassifNet forward.

    x: (batch, n_feats); returns (batch, n_classes) log-probabilities.
    num_batch_tiles: 1 for v5e/v6e (single TensorCore -> grid is a serial
    loop, so one maximal tile); 2 on v7x so each TC gets one tile.
    """
    batch, n_feats = x.shape
    h1_dim = w1.shape[1]
    h2_dim = w2.shape[1]
    n_classes = w3.shape[1]

    # As few, as large batch tiles as possible (16-row minimum for bf16
    # sublane packing; capped so the x/out tiles stay well inside VMEM).
    block_b = _round_up(pl.cdiv(batch, max(1, num_batch_tiles)), 16)
    block_b = min(block_b, max_block_b)
    b_pad = _round_up(batch, block_b)
    if b_pad != batch:
        x = jnp.pad(x, ((0, b_pad - batch), (0, 0)))
    grid = (b_pad // block_b,)

    flops = 2 * b_pad * (n_feats * h1_dim + h1_dim * h2_dim
                         + h2_dim * n_classes)
    transcendentals = b_pad * n_classes  # exp() in the softmax
    bytes_accessed = (_nbytes(x) + _nbytes(w1) + _nbytes(b1) + _nbytes(w2)
                      + _nbytes(b2) + _nbytes(w3) + _nbytes(b3)
                      + b_pad * n_classes * 4)

    out = pl.pallas_call(
        classif_kernel,
        out_shape=jax.ShapeDtypeStruct((b_pad, n_classes), jnp.float32),
        grid=grid,
        in_specs=[
            # x: tiled over batch (double-buffered automatically).
            pl.BlockSpec((block_b, n_feats), lambda i: (i, 0)),
            # Weights / biases: same block every step -> VMEM-resident.
            pl.BlockSpec(w1.shape, lambda i: (0, 0)),
            pl.BlockSpec(b1.shape, lambda i: (0, 0)),
            pl.BlockSpec(w2.shape, lambda i: (0, 0)),
            pl.BlockSpec(b2.shape, lambda i: (0, 0)),
            pl.BlockSpec(w3.shape, lambda i: (0, 0)),
            pl.BlockSpec(b3.shape, lambda i: (0, 0)),
        ],
        out_specs=pl.BlockSpec((block_b, n_classes), lambda i: (i, 0)),
        compiler_params=pltpu.CompilerParams(
            dimension_semantics=("parallel",)),
        cost_estimate=pl.CostEstimate(
            flops=flops,
            transcendentals=transcendentals,
            bytes_accessed=bytes_accessed),
    )(x, w1, b1, w2, b2, w3, b3)

    if b_pad != batch:
        out = out[:batch]
    return out


def init_linear_params(key, fan_in, fan_out):
    """Deterministic init mimicking nn.Linear's uniform(-1/sqrt(fan_in), ...)."""
    kw, kb = jax.random.split(key)
    bound = 1.0 / jnp.sqrt(jnp.float32(fan_in))
    # Stored as (in, out): transpose of PyTorch's (out, in).
    w = jax.random.uniform(kw, (fan_in, fan_out), jnp.float32, -bound, bound)
    b = jax.random.uniform(kb, (1, fan_out), jnp.float32, -bound, bound)
    return w, b


if __name__ == "__main__":
    # Shapes implied by the module: flat per-sample feature vectors.
    batch = 256
    n_feats = 32
    h_nodes = (64, 32)
    n_classes = 8

    key = jax.random.PRNGKey(0)
    kx, k1, k2, k3 = jax.random.split(key, 4)

    x_f32 = jax.random.normal(kx, (batch, n_feats), jnp.float32)
    w1_f32, b1 = init_linear_params(k1, n_feats, h_nodes[0])
    w2_f32, b2 = init_linear_params(k2, h_nodes[0], h_nodes[1])
    w3_f32, b3 = init_linear_params(k3, h_nodes[1], n_classes)

    # bf16 activations/weights (f32 accumulation inside the kernel).
    x = x_f32.astype(jnp.bfloat16)
    w1 = w1_f32.astype(jnp.bfloat16)
    w2 = w2_f32.astype(jnp.bfloat16)
    w3 = w3_f32.astype(jnp.bfloat16)

    # num_batch_tiles=1: single grid step (best on single-TC v5e/v6e).
    # On v7x pass num_batch_tiles=2 to engage the megacore split.
    out = classif_net_forward(x, w1, b1, w2, b2, w3, b3, num_batch_tiles=1)
    out = jax.block_until_ready(out)

    # Pure-JAX reference mirroring the kernel's bf16-in / f32-accumulate math.
    xf = x.astype(jnp.float32)
    h1 = jnp.maximum(xf @ w1.astype(jnp.float32) + b1, 0.0)
    h2 = jnp.maximum(
        h1.astype(jnp.bfloat16).astype(jnp.float32) @ w2.astype(jnp.float32) + b2,
        0.0)
    logits = (h2.astype(jnp.bfloat16).astype(jnp.float32)
              @ w3.astype(jnp.float32) + b3)
    ref = jax.nn.log_softmax(logits, axis=1)

    assert out.shape == (batch, n_classes), out.shape
    max_err = float(jnp.max(jnp.abs(out - ref)))
    assert jnp.allclose(out, ref, atol=1e-2, rtol=1e-2), f"mismatch, max_err={max_err}"

    print("KERNEL_OK")
</pallas_src>

<mosaic_0001>
module attributes {stable_mosaic.version = 11 : i64} {
  func.func @classif_kernel(%arg0: i32, %arg1: memref<256x32xbf16, #tpu.memory_space<vmem>>, %arg2: memref<32x64xbf16, #tpu.memory_space<vmem>>, %arg3: memref<1x64xf32, #tpu.memory_space<vmem>>, %arg4: memref<64x32xbf16, #tpu.memory_space<vmem>>, %arg5: memref<1x32xf32, #tpu.memory_space<vmem>>, %arg6: memref<32x8xbf16, #tpu.memory_space<vmem>>, %arg7: memref<1x8xf32, #tpu.memory_space<vmem>>, %arg8: memref<256x8xf32, #tpu.memory_space<vmem>>) attributes {dimension_semantics = [#tpu.dimension_semantics<parallel>], iteration_bounds = array<i64: 1>, scalar_prefetch = 0 : i64, scratch_operands = 0 : i64, tpu.core_type = #tpu.core_type<tc>, window_params = [{transform_indices = @transform_0, window_bounds = array<i64: 256, 32>}, {pipeline_mode = #tpu.pipeline_mode<synchronous>, transform_indices = @transform_1, window_bounds = array<i64: 32, 64>}, {pipeline_mode = #tpu.pipeline_mode<synchronous>, transform_indices = @transform_2, window_bounds = array<i64: 1, 64>}, {pipeline_mode = #tpu.pipeline_mode<synchronous>, transform_indices = @transform_3, window_bounds = array<i64: 64, 32>}, {pipeline_mode = #tpu.pipeline_mode<synchronous>, transform_indices = @transform_4, window_bounds = array<i64: 1, 32>}, {pipeline_mode = #tpu.pipeline_mode<synchronous>, transform_indices = @transform_5, window_bounds = array<i64: 32, 8>}, {pipeline_mode = #tpu.pipeline_mode<synchronous>, transform_indices = @transform_6, window_bounds = array<i64: 1, 8>}, {transform_indices = @transform_7, window_bounds = array<i64: 256, 8>}]} {
    %c0 = arith.constant 0 : index
    %c0_0 = arith.constant 0 : index
    %0 = vector.load %arg1[%c0, %c0_0] : memref<256x32xbf16, #tpu.memory_space<vmem>>, vector<256x32xbf16>
    %c0_1 = arith.constant 0 : index
    %c0_2 = arith.constant 0 : index
    %1 = vector.load %arg2[%c0_1, %c0_2] : memref<32x64xbf16, #tpu.memory_space<vmem>>, vector<32x64xbf16>
    %cst = arith.constant dense<0.000000e+00> : vector<256x64xf32>
    %2 = tpu.matmul %0, %1, %cst {dimension_numbers = #tpu.dot_dimension_numbers<[1], [0], [0], [1], [0, 0, 1, 1], [], []>} : vector<256x32xbf16>, vector<32x64xbf16>, vector<256x64xf32> -> vector<256x64xf32>
    %c0_3 = arith.constant 0 : index
    %c0_4 = arith.constant 0 : index
    %3 = vector.load %arg3[%c0_3, %c0_4] : memref<1x64xf32, #tpu.memory_space<vmem>>, vector<1x64xf32>
    %4 = vector.broadcast %3 : vector<1x64xf32> to vector<256x64xf32>
    %5 = arith.addf %2, %4 : vector<256x64xf32>
    %cst_5 = arith.constant 0.000000e+00 : f32
    %6 = vector.broadcast %cst_5 : f32 to vector<256x64xf32>
    %7 = arith.maximumf %5, %6 : vector<256x64xf32>
    %8 = arith.truncf %7 : vector<256x64xf32> to vector<256x64xbf16>
    %c0_6 = arith.constant 0 : index
    %c0_7 = arith.constant 0 : index
    %9 = vector.load %arg4[%c0_6, %c0_7] : memref<64x32xbf16, #tpu.memory_space<vmem>>, vector<64x32xbf16>
    %cst_8 = arith.constant dense<0.000000e+00> : vector<256x32xf32>
    %10 = tpu.matmul %8, %9, %cst_8 {dimension_numbers = #tpu.dot_dimension_numbers<[1], [0], [0], [1], [0, 0, 1, 1], [], []>} : vector<256x64xbf16>, vector<64x32xbf16>, vector<256x32xf32> -> vector<256x32xf32>
    %c0_9 = arith.constant 0 : index
    %c0_10 = arith.constant 0 : index
    %11 = vector.load %arg5[%c0_9, %c0_10] : memref<1x32xf32, #tpu.memory_space<vmem>>, vector<1x32xf32>
    %12 = vector.broadcast %11 : vector<1x32xf32> to vector<256x32xf32>
    %13 = arith.addf %10, %12 : vector<256x32xf32>
    %cst_11 = arith.constant 0.000000e+00 : f32
    %14 = vector.broadcast %cst_11 : f32 to vector<256x32xf32>
    %15 = arith.maximumf %13, %14 : vector<256x32xf32>
    %16 = arith.truncf %15 : vector<256x32xf32> to vector<256x32xbf16>
    %c0_12 = arith.constant 0 : index
    %c0_13 = arith.constant 0 : index
    %17 = vector.load %arg6[%c0_12, %c0_13] : memref<32x8xbf16, #tpu.memory_space<vmem>>, vector<32x8xbf16>
    %cst_14 = arith.constant dense<0.000000e+00> : vector<256x8xf32>
    %18 = tpu.matmul %16, %17, %cst_14 {dimension_numbers = #tpu.dot_dimension_numbers<[1], [0], [0], [1], [0, 0, 1, 1], [], []>} : vector<256x32xbf16>, vector<32x8xbf16>, vector<256x8xf32> -> vector<256x8xf32>
    %c0_15 = arith.constant 0 : index
    %c0_16 = arith.constant 0 : index
    %19 = vector.load %arg7[%c0_15, %c0_16] : memref<1x8xf32, #tpu.memory_space<vmem>>, vector<1x8xf32>
    %20 = vector.broadcast %19 : vector<1x8xf32> to vector<256x8xf32>
    %21 = arith.addf %18, %20 : vector<256x8xf32>
    %cst_17 = arith.constant dense<0xFF800000> : vector<256xf32>
    %22 = vector.multi_reduction <maximumf>, %21, %cst_17 [1] : vector<256x8xf32> to vector<256xf32>
    %23 = vector.shape_cast %22 : vector<256xf32> to vector<256x1xf32>
    %24 = vector.broadcast %23 : vector<256x1xf32> to vector<256x8xf32>
    %25 = arith.subf %21, %24 : vector<256x8xf32>
    %26 = math.exp %25 : vector<256x8xf32>
    %cst_18 = arith.constant dense<0.000000e+00> : vector<256xf32>
    %27 = vector.multi_reduction <add>, %26, %cst_18 [1] : vector<256x8xf32> to vector<256xf32>
    %28 = vector.shape_cast %27 : vector<256xf32> to vector<256x1xf32>
    %29 = math.log %28 : vector<256x1xf32>
    %30 = vector.broadcast %29 : vector<256x1xf32> to vector<256x8xf32>
    %31 = arith.subf %25, %30 : vector<256x8xf32>
    %c0_19 = arith.constant 0 : index
    %c0_20 = arith.constant 0 : index
    %32 = vector.load %arg8[%c0_19, %c0_20] : memref<256x8xf32, #tpu.memory_space<vmem>>, vector<256x8xf32>
    tpu.vector_store %arg8[%c0_19, %c0_20], %31 {strides = array<i32>} : memref<256x8xf32, #tpu.memory_space<vmem>>, vector<256x8xf32>,
    return
  }
  func.func @transform_0(%arg0: i32) -> (i32, i32) {
    %c0_i32 = arith.constant 0 : i32
    %c0_i32_0 = arith.constant 0 : i32
    return %arg0, %c0_i32 : i32, i32
  }
  func.func @transform_1(%arg0: i32) -> (i32, i32) {
    %c0_i32 = arith.constant 0 : i32
    %c0_i32_0 = arith.constant 0 : i32
    %c0_i32_1 = arith.constant 0 : i32
    return %c0_i32, %c0_i32_0 : i32, i32
  }
  func.func @transform_2(%arg0: i32) -> (i32, i32) {
    %c0_i32 = arith.constant 0 : i32
    %c0_i32_0 = arith.constant 0 : i32
    %c0_i32_1 = arith.constant 0 : i32
    return %c0_i32, %c0_i32_0 : i32, i32
  }
  func.func @transform_3(%arg0: i32) -> (i32, i32) {
    %c0_i32 = arith.constant 0 : i32
    %c0_i32_0 = arith.constant 0 : i32
    %c0_i32_1 = arith.constant 0 : i32
    return %c0_i32, %c0_i32_0 : i32, i32
  }
  func.func @transform_4(%arg0: i32) -> (i32, i32) {
    %c0_i32 = arith.constant 0 : i32
    %c0_i32_0 = arith.constant 0 : i32
    %c0_i32_1 = arith.constant 0 : i32
    return %c0_i32, %c0_i32_0 : i32, i32
  }
  func.func @transform_5(%arg0: i32) -> (i32, i32) {
    %c0_i32 = arith.constant 0 : i32
    %c0_i32_0 = arith.constant 0 : i32
    %c0_i32_1 = arith.constant 0 : i32
    return %c0_i32, %c0_i32_0 : i32, i32
  }
  func.func @transform_6(%arg0: i32) -> (i32, i32) {
    %c0_i32 = arith.constant 0 : i32
    %c0_i32_0 = arith.constant 0 : i32
    %c0_i32_1 = arith.constant 0 : i32
    return %c0_i32, %c0_i32_0 : i32, i32
  }
  func.func @transform_7(%arg0: i32) -> (i32, i32) {
    %c0_i32 = arith.constant 0 : i32
    %c0_i32_0 = arith.constant 0 : i32
    return %arg0, %c0_i32 : i32, i32
  }
}

</mosaic_0001>

<llo_original>
// kernel: tpu_custom_call.1
$region0: #{tpu_custom_call.1}
  #allocation0 [shape = 'u32[]', space=smem, size = 0x4, offset = 0x4, fixed_abs, tag = 'smem constant byte address 0x4 - core index']
  #allocation1 [shape = 'u32[144,128]{1,0:T(1,128)}', space=vmem, size = 0x12000, scoped, tag = 'internal scratch']
  %s0 = inlined_call_operand.vmem [shape: bf16[256,32], index: 0, kind: input, shape index: {}]
  %s1 = inlined_call_operand.vmem [shape: bf16[32,64], index: 1, kind: input, shape index: {}]
  %s2 = inlined_call_operand.vmem [shape: f32[1,64], index: 2, kind: input, shape index: {}]
  %s3 = inlined_call_operand.vmem [shape: bf16[64,32], index: 3, kind: input, shape index: {}]
  %s4 = inlined_call_operand.vmem [shape: f32[1,32], index: 4, kind: input, shape index: {}]
  %s5 = inlined_call_operand.vmem [shape: bf16[32,8], index: 5, kind: input, shape index: {}]
  %s6 = inlined_call_operand.vmem [shape: f32[1,8], index: 6, kind: input, shape index: {}]
  %s7 = inlined_call_operand.vmem [shape: f32[256,8], index: 7, kind: output, shape index: {}]
  %s8 = sld [smem:[#allocation0]]
  $region38: #{tpu_custom_call.1} parent=0
    _
  %s10 = ssub.s32 1, %s8
  %s11 = scalar_select 0, %s10, %s8
  // Predicated region
  $region2: #{tpu_custom_call.1} parent=0 // pred_check
    _
  $region3: #{tpu_custom_call.1} parent=0 // pred_check_branch
    %13 = sbr.rel (0) target = $region5
  $region4: #{tpu_custom_call.1} parent=0 // pred_region
    _
  $region5: #{tpu_custom_call.1} parent=0 // pred_fallthru
    _
  // Predicated region
  $region6: #{tpu_custom_call.1} parent=0 // pred_check
    _
  $region7: #{tpu_custom_call.1} parent=0 // pred_check_branch
    %15 = sbr.rel (0) target = $region9
  $region8: #{tpu_custom_call.1} parent=0 // pred_region
    _
  $region9: #{tpu_custom_call.1} parent=0 // pred_fallthru
    _
  // Predicated region
  $region10: #{tpu_custom_call.1} parent=0 // pred_check
    _
  $region11: #{tpu_custom_call.1} parent=0 // pred_check_branch
    %17 = sbr.rel (0) target = $region13
  $region12: #{tpu_custom_call.1} parent=0 // pred_region
    _
  $region13: #{tpu_custom_call.1} parent=0 // pred_fallthru
    _
  // Predicated region
  $region14: #{tpu_custom_call.1} parent=0 // pred_check
    _
  $region15: #{tpu_custom_call.1} parent=0 // pred_check_branch
    %19 = sbr.rel (0) target = $region17
  $region16: #{tpu_custom_call.1} parent=0 // pred_region
    _
  $region17: #{tpu_custom_call.1} parent=0 // pred_fallthru
    _
  // Predicated region
  $region18: #{tpu_custom_call.1} parent=0 // pred_check
    _
  $region19: #{tpu_custom_call.1} parent=0 // pred_check_branch
    %21 = sbr.rel (0) target = $region21
  $region20: #{tpu_custom_call.1} parent=0 // pred_region
    _
  $region21: #{tpu_custom_call.1} parent=0 // pred_fallthru
    _
  // Predicated region
  $region22: #{tpu_custom_call.1} parent=0 // pred_check
    _
  $region23: #{tpu_custom_call.1} parent=0 // pred_check_branch
    %23 = sbr.rel (0) target = $region25
  $region24: #{tpu_custom_call.1} parent=0 // pred_region
    _
  $region25: #{tpu_custom_call.1} parent=0 // pred_fallthru
    _
  // Predicated region
  $region26: #{tpu_custom_call.1} parent=0 // pred_check
    _
  $region27: #{tpu_custom_call.1} parent=0 // pred_check_branch
    %25 = sbr.rel (0) target = $region29
  $region28: #{tpu_custom_call.1} parent=0 // pred_region
    _
  $region29: #{tpu_custom_call.1} parent=0 // pred_fallthru
    _
  %v27 = vld [vmem:[%s0] sm:$0xf]
  %v28 = vld [vmem:[%s0 + $0x4] sm:$0xf]
  %v29 = vld [vmem:[%s0 + $0x8] sm:$0xf]
  %v30 = vld [vmem:[%s0 + $0xc] sm:$0xf]
  %v31 = vld [vmem:[%s0 + $0x10] sm:$0xf]
  %v32 = vld [vmem:[%s0 + $0x14] sm:$0xf]
  %v33 = vld [vmem:[%s0 + $0x18] sm:$0xf]
  %v34 = vld [vmem:[%s0 + $0x1c] sm:$0xf]
  %v35 = vld [vmem:[%s0 + $0x20] sm:$0xf]
  %v36 = vld [vmem:[%s0 + $0x24] sm:$0xf]
  %v37 = vld [vmem:[%s0 + $0x28] sm:$0xf]
  %v38 = vld [vmem:[%s0 + $0x2c] sm:$0xf]
  %v39 = vld [vmem:[%s0 + $0x30] sm:$0xf]
  %v40 = vld [vmem:[%s0 + $0x34] sm:$0xf]
  %v41 = vld [vmem:[%s0 + $0x38] sm:$0xf]
  %v42 = vld [vmem:[%s0 + $0x3c] sm:$0xf]
  %v43 = vld [vmem:[%s0 + $0x40] sm:$0xf]
  %v44 = vld [vmem:[%s0 + $0x44] sm:$0xf]
  %v45 = vld [vmem:[%s0 + $0x48] sm:$0xf]
  %v46 = vld [vmem:[%s0 + $0x4c] sm:$0xf]
  %v47 = vld [vmem:[%s0 + $0x50] sm:$0xf]
  %v48 = vld [vmem:[%s0 + $0x54] sm:$0xf]
  %v49 = vld [vmem:[%s0 + $0x58] sm:$0xf]
  %v50 = vld [vmem:[%s0 + $0x5c] sm:$0xf]
  %v51 = vld [vmem:[%s0 + $0x60] sm:$0xf]
  %v52 = vld [vmem:[%s0 + $0x64] sm:$0xf]
  %v53 = vld [vmem:[%s0 + $0x68] sm:$0xf]
  %v54 = vld [vmem:[%s0 + $0x6c] sm:$0xf]
  %v55 = vld [vmem:[%s0 + $0x70] sm:$0xf]
  %v56 = vld [vmem:[%s0 + $0x74] sm:$0xf]
  %v57 = vld [vmem:[%s0 + $0x78] sm:$0xf]
  %v58 = vld [vmem:[%s0 + $0x7c] sm:$0xf]
  %v59 = vld [vmem:[%s1] sm:$0xf]
  %v60 = vld [vmem:[%s1 + $0x4] sm:$0xf]
  %v61 = vld [vmem:[%s1 + $0x8] sm:$0xf]
  %v62 = vld [vmem:[%s1 + $0xc] sm:$0xf]
  %v63 = vld [vmem:[%s2] sm:$0x1]
  %v65 = vlaneseq
  %v66 = vshrl.u32 %v65, 7
  %v67 = vsub.s32 0, %v66
  %v68 = vrot.slane %v63, %v67
  %v102 = vunpack.c.l.b16 %v27
  %v103 = vunpack.c.l.b16 %v28
  %v104 = vunpack.c.l.b16 %v29
  %v105 = vunpack.c.l.b16 %v30
  %v106 = vunpack.c.l.b16 %v31
  %v107 = vunpack.c.l.b16 %v32
  %v108 = vunpack.c.l.b16 %v33
  %v109 = vunpack.c.l.b16 %v34
  %v110 = vunpack.c.l.b16 %v35
  %v111 = vunpack.c.l.b16 %v36
  %v112 = vunpack.c.l.b16 %v37
  %v113 = vunpack.c.l.b16 %v38
  %v114 = vunpack.c.l.b16 %v39
  %v115 = vunpack.c.l.b16 %v40
  %v116 = vunpack.c.l.b16 %v41
  %v117 = vunpack.c.l.b16 %v42
  %v118 = vunpack.c.l.b16 %v43
  %v119 = vunpack.c.l.b16 %v44
  %v120 = vunpack.c.l.b16 %v45
  %v121 = vunpack.c.l.b16 %v46
  %v122 = vunpack.c.l.b16 %v47
  %v123 = vunpack.c.l.b16 %v48
  %v124 = vunpack.c.l.b16 %v49
  %v125 = vunpack.c.l.b16 %v50
  %v126 = vunpack.c.l.b16 %v51
  %v127 = vunpack.c.l.b16 %v52
  %v128 = vunpack.c.l.b16 %v53
  %v129 = vunpack.c.l.b16 %v54
  %v130 = vunpack.c.l.b16 %v55
  %v131 = vunpack.c.l.b16 %v56
  %v132 = vunpack.c.l.b16 %v57
  %v133 = vunpack.c.l.b16 %v58
  %v134 = vpack.c.b16 %v103, %v102
  %v135 = vpack.c.b16 %v105, %v104
  %v136 = vpack.c.b16 %v107, %v106
  %v137 = vpack.c.b16 %v109, %v108
  %v138 = vpack.c.b16 %v111, %v110
  %v139 = vpack.c.b16 %v113, %v112
  %v140 = vpack.c.b16 %v115, %v114
  %v141 = vpack.c.b16 %v117, %v116
  %v142 = vpack.c.b16 %v119, %v118
  %v143 = vpack.c.b16 %v121, %v120
  %v144 = vpack.c.b16 %v123, %v122
  %v145 = vpack.c.b16 %v125, %v124
  %v146 = vpack.c.b16 %v127, %v126
  %v147 = vpack.c.b16 %v129, %v128
  %v148 = vpack.c.b16 %v131, %v130
  %v149 = vpack.c.b16 %v133, %v132
  %v154 = vunpack.c.l.b16 %v59
  %v155 = vunpack.c.l.b16 %v60
  %v156 = vunpack.c.l.b16 %v61
  %v157 = vunpack.c.l.b16 %v62
  %v158 = vpack.c.b16 %v155, %v154
  %v159 = vpack.c.b16 %v157, %v156
  %vm162 = vcmask 261120
  %v164 = vsel %vm162, %v134, 0
  %v167 = vsel %vm162, %v135, 0
  %v170 = vsel %vm162, %v136, 0
  %v173 = vsel %vm162, %v137, 0
  %v176 = vsel %vm162, %v138, 0
  %v179 = vsel %vm162, %v139, 0
  %v182 = vsel %vm162, %v140, 0
  %v185 = vsel %vm162, %v141, 0
  %v188 = vsel %vm162, %v142, 0
  %v191 = vsel %vm162, %v143, 0
  %v194 = vsel %vm162, %v144, 0
  %v197 = vsel %vm162, %v145, 0
  %v200 = vsel %vm162, %v146, 0
  %v203 = vsel %vm162, %v147, 0
  %v206 = vsel %vm162, %v148, 0
  %v209 = vsel %vm162, %v149, 0
  %211 = vmatprep.subr.bf16.mxu0 0
  %212 = vmatpush1.bf16.msra.mxu0 %v158
  %213 = vmatprep.subr.bf16.mxu0 0
  %214 = vmatpush1.bf16.msra.mxu0 %v159
  %215 = vmatprep.subr.bf16.mxu0 0
  %216 = vmatpush1.bf16.msra.mxu0 0
  %217 = vmatprep.subr.bf16.mxu0 0
  %218 = vmatpush1.bf16.msra.mxu0 0
  %219 = vmatprep.subr.bf16.mxu0 0
  %220 = vmatpush1.bf16.msra.mxu0 0
  %221 = vmatprep.subr.bf16.mxu0 0
  %222 = vmatpush1.bf16.msra.mxu0 0
  %223 = vmatprep.subr.bf16.mxu0 0
  %224 = vmatpush1.bf16.msra.mxu0 0
  %225 = vmatprep.subr.bf16.mxu0 0
  %226 = vmatpush1.bf16.msra.mxu0 0
  %227 = vmatprep.subr.bf16.mxu0 0
  %228 = vmatpush1.bf16.msra.mxu0 0
  %229 = vmatprep.subr.bf16.mxu0 0
  %230 = vmatpush1.bf16.msra.mxu0 0
  %231 = vmatprep.subr.bf16.mxu0 0
  %232 = vmatpush1.bf16.msra.mxu0 0
  %233 = vmatprep.subr.bf16.mxu0 0
  %234 = vmatpush1.bf16.msra.mxu0 0
  %235 = vmatprep.subr.bf16.mxu0 0
  %236 = vmatpush1.bf16.msra.mxu0 0
  %237 = vmatprep.subr.bf16.mxu0 0
  %238 = vmatpush1.bf16.msra.mxu0 0
  %239 = vmatprep.subr.bf16.mxu0 0
  %240 = vmatpush1.bf16.msra.mxu0 0
  %241 = vmatprep.subr.bf16.mxu0 0
  %242 = vmatpush1.bf16.msra.mxu0 0
  %243 = vmatprep.mubr.bf16.mxu0 0
  %244 = vmatmul.mubr.bf16.gmra.mrb[0].mxu0 %v164
  %v245 = vpop.f32.mrb[0].mxu0
  %v246 = vadd.f32 %v68, %v245
  %v247 = vpop.f32.mrb[0].mxu0
  %v248 = vpop.f32.mrb[0].mxu0
  %v249 = vadd.f32 %v68, %v248
  %v250 = vpop.f32.mrb[0].mxu0
  %251 = vmatprep.mubr.bf16.mxu0 0
  %252 = vmatmul.mubr.bf16.gmra.mrb[0].mxu0 %v167
  %v253 = vpop.f32.mrb[0].mxu0
  %v254 = vadd.f32 %v68, %v253
  %v255 = vpop.f32.mrb[0].mxu0
  %v256 = vpop.f32.mrb[0].mxu0
  %v257 = vadd.f32 %v68, %v256
  %v258 = vpop.f32.mrb[0].mxu0
  %259 = vmatprep.mubr.bf16.mxu0 0
  %260 = vmatmul.mubr.bf16.gmra.mrb[0].mxu0 %v170
  %v261 = vpop.f32.mrb[0].mxu0
  %v262 = vadd.f32 %v68, %v261
  %v263 = vpop.f32.mrb[0].mxu0
  %v264 = vpop.f32.mrb[0].mxu0
  %v265 = vadd.f32 %v68, %v264
  %v266 = vpop.f32.mrb[0].mxu0
  %267 = vmatprep.mubr.bf16.mxu0 0
  %268 = vmatmul.mubr.bf16.gmra.mrb[0].mxu0 %v173
  %v269 = vpop.f32.mrb[0].mxu0
  %v270 = vadd.f32 %v68, %v269
  %v271 = vpop.f32.mrb[0].mxu0
  %v272 = vpop.f32.mrb[0].mxu0
  %v273 = vadd.f32 %v68, %v272
  %v274 = vpop.f32.mrb[0].mxu0
  %275 = vmatprep.mubr.bf16.mxu0 0
  %276 = vmatmul.mubr.bf16.gmra.mrb[0].mxu0 %v176
  %v277 = vpop.f32.mrb[0].mxu0
  %v278 = vadd.f32 %v68, %v277
  %v279 = vpop.f32.mrb[0].mxu0
  %v280 = vpop.f32.mrb[0].mxu0
  %v281 = vadd.f32 %v68, %v280
  %v282 = vpop.f32.mrb[0].mxu0
  %283 = vmatprep.mubr.bf16.mxu0 0
  %284 = vmatmul.mubr.bf16.gmra.mrb[0].mxu0 %v179
  %v285 = vpop.f32.mrb[0].mxu0
  %v286 = vadd.f32 %v68, %v285
  %v287 = vpop.f32.mrb[0].mxu0
  %v288 = vpop.f32.mrb[0].mxu0
  %v289 = vadd.f32 %v68, %v288
  %v290 = vpop.f32.mrb[0].mxu0
  %291 = vmatprep.mubr.bf16.mxu0 0
  %292 = vmatmul.mubr.bf16.gmra.mrb[0].mxu0 %v182
  %v293 = vpop.f32.mrb[0].mxu0
  %v294 = vadd.f32 %v68, %v293
  %v295 = vpop.f32.mrb[0].mxu0
  %v296 = vpop.f32.mrb[0].mxu0
  %v297 = vadd.f32 %v68, %v296
  %v298 = vpop.f32.mrb[0].mxu0
  %299 = vmatprep.mubr.bf16.mxu0 0
  %300 = vmatmul.mubr.bf16.gmra.mrb[0].mxu0 %v185
  %v301 = vpop.f32.mrb[0].mxu0
  %v302 = vadd.f32 %v68, %v301
  %v303 = vpop.f32.mrb[0].mxu0
  %v304 = vpop.f32.mrb[0].mxu0
  %v305 = vadd.f32 %v68, %v304
  %v306 = vpop.f32.mrb[0].mxu0
  %307 = vmatprep.mubr.bf16.mxu0 0
  %308 = vmatmul.mubr.bf16.gmra.mrb[0].mxu0 %v188
  %v309 = vpop.f32.mrb[0].mxu0
  %v310 = vadd.f32 %v68, %v309
  %v311 = vpop.f32.mrb[0].mxu0
  %v312 = vpop.f32.mrb[0].mxu0
  %v313 = vadd.f32 %v68, %v312
  %v314 = vpop.f32.mrb[0].mxu0
  %315 = vmatprep.mubr.bf16.mxu0 0
  %316 = vmatmul.mubr.bf16.gmra.mrb[0].mxu0 %v191
  %v317 = vpop.f32.mrb[0].mxu0
  %v318 = vadd.f32 %v68, %v317
  %v319 = vpop.f32.mrb[0].mxu0
  %v320 = vpop.f32.mrb[0].mxu0
  %v321 = vadd.f32 %v68, %v320
  %v322 = vpop.f32.mrb[0].mxu0
  %323 = vmatprep.mubr.bf16.mxu0 0
  %324 = vmatmul.mubr.bf16.gmra.mrb[0].mxu0 %v194
  %v325 = vpop.f32.mrb[0].mxu0
  %v326 = vadd.f32 %v68, %v325
  %v327 = vpop.f32.mrb[0].mxu0
  %v328 = vpop.f32.mrb[0].mxu0
  %v329 = vadd.f32 %v68, %v328
  %v330 = vpop.f32.mrb[0].mxu0
  %331 = vmatprep.mubr.bf16.mxu0 0
  %332 = vmatmul.mubr.bf16.gmra.mrb[0].mxu0 %v197
  %v333 = vpop.f32.mrb[0].mxu0
  %v334 = vadd.f32 %v68, %v333
  %v335 = vpop.f32.mrb[0].mxu0
  %v336 = vpop.f32.mrb[0].mxu0
  %v337 = vadd.f32 %v68, %v336
  %v338 = vpop.f32.mrb[0].mxu0
  %339 = vmatprep.mubr.bf16.mxu0 0
  %340 = vmatmul.mubr.bf16.gmra.mrb[0].mxu0 %v200
  %v341 = vpop.f32.mrb[0].mxu0
  %v342 = vadd.f32 %v68, %v341
  %v343 = vpop.f32.mrb[0].mxu0
  %v344 = vpop.f32.mrb[0].mxu0
  %v345 = vadd.f32 %v68, %v344
  %v346 = vpop.f32.mrb[0].mxu0
  %347 = vmatprep.mubr.bf16.mxu0 0
  %348 = vmatmul.mubr.bf16.gmra.mrb[0].mxu0 %v203
  %v349 = vpop.f32.mrb[0].mxu0
  %v350 = vadd.f32 %v68, %v349
  %v351 = vpop.f32.mrb[0].mxu0
  %v352 = vpop.f32.mrb[0].mxu0
  %v353 = vadd.f32 %v68, %v352
  %v354 = vpop.f32.mrb[0].mxu0
  %355 = vmatprep.mubr.bf16.mxu0 0
  %356 = vmatmul.mubr.bf16.gmra.mrb[0].mxu0 %v206
  %v357 = vpop.f32.mrb[0].mxu0
  %v358 = vadd.f32 %v68, %v357
  %v359 = vpop.f32.mrb[0].mxu0
  %v360 = vpop.f32.mrb[0].mxu0
  %v361 = vadd.f32 %v68, %v360
  %v362 = vpop.f32.mrb[0].mxu0
  %363 = vmatprep.mubr.bf16.mxu0 0
  %364 = vmatmul.mubr.bf16.gmra.mrb[0].mxu0 %v209
  %v365 = vpop.f32.mrb[0].mxu0
  %v366 = vadd.f32 %v68, %v365
  %v367 = vpop.f32.mrb[0].mxu0
  %v368 = vpop.f32.mrb[0].mxu0
  %v369 = vadd.f32 %v68, %v368
  %v370 = vpop.f32.mrb[0].mxu0
  %371 = vdwg.mxu0
  %v372 = vmax.f32 %v246, 0.0
  %v373 = vmax.f32 %v249, 0.0
  %v374 = vmax.f32 %v254, 0.0
  %v375 = vmax.f32 %v257, 0.0
  %v376 = vmax.f32 %v262, 0.0
  %v377 = vmax.f32 %v265, 0.0
  %v378 = vmax.f32 %v270, 0.0
  %v379 = vmax.f32 %v273, 0.0
  %v380 = vmax.f32 %v278, 0.0
  %v381 = vmax.f32 %v281, 0.0
  %v382 = vmax.f32 %v286, 0.0
  %v383 = vmax.f32 %v289, 0.0
  %v384 = vmax.f32 %v294, 0.0
  %v385 = vmax.f32 %v297, 0.0
  %v386 = vmax.f32 %v302, 0.0
  %v387 = vmax.f32 %v305, 0.0
  %v388 = vmax.f32 %v310, 0.0
  %v389 = vmax.f32 %v313, 0.0
  %v390 = vmax.f32 %v318, 0.0
  %v391 = vmax.f32 %v321, 0.0
  %v392 = vmax.f32 %v326, 0.0
  %v393 = vmax.f32 %v329, 0.0
  %v394 = vmax.f32 %v334, 0.0
  %v395 = vmax.f32 %v337, 0.0
  %v396 = vmax.f32 %v342, 0.0
  %v397 = vmax.f32 %v345, 0.0
  %v398 = vmax.f32 %v350, 0.0
  %v399 = vmax.f32 %v353, 0.0
  %v400 = vmax.f32 %v358, 0.0
  %v401 = vmax.f32 %v361, 0.0
  %v402 = vmax.f32 %v366, 0.0
  %v403 = vmax.f32 %v369, 0.0
  %v404 = vpack.c.bf16 %v373, %v372
  %v405 = vpack.c.bf16 %v375, %v374
  %v406 = vpack.c.bf16 %v377, %v376
  %v407 = vpack.c.bf16 %v379, %v378
  %v408 = vpack.c.bf16 %v381, %v380
  %v409 = vpack.c.bf16 %v383, %v382
  %v410 = vpack.c.bf16 %v385, %v384
  %v411 = vpack.c.bf16 %v387, %v386
  %v412 = vpack.c.bf16 %v389, %v388
  %v413 = vpack.c.bf16 %v391, %v390
  %v414 = vpack.c.bf16 %v393, %v392
  %v415 = vpack.c.bf16 %v395, %v394
  %v416 = vpack.c.bf16 %v397, %v396
  %v417 = vpack.c.bf16 %v399, %v398
  %v418 = vpack.c.bf16 %v401, %v400
  %v419 = vpack.c.bf16 %v403, %v402
  %v420 = vld [vmem:[%s3] sm:$0xf]
  %v421 = vld [vmem:[%s3 + $0x4] sm:$0xf]
  %v422 = vld [vmem:[%s3 + $0x8] sm:$0xf]
  %v423 = vld [vmem:[%s3 + $0xc] sm:$0xf]
  %v424 = vld [vmem:[%s3 + $0x10] sm:$0xf]
  %v425 = vld [vmem:[%s3 + $0x14] sm:$0xf]
  %v426 = vld [vmem:[%s3 + $0x18] sm:$0xf]
  %v427 = vld [vmem:[%s3 + $0x1c] sm:$0xf]
  %v428 = vld [vmem:[%s4] sm:$0x1]
  %v430 = vlaneseq
  %v431 = vshrl.u32 %v430, 7
  %v432 = vsub.s32 0, %v431
  %v433 = vrot.slane %v428, %v432
  %v443 = vunpack.c.l.b16 %v420
  %v444 = vunpack.c.l.b16 %v421
  %v445 = vunpack.c.l.b16 %v422
  %v446 = vunpack.c.l.b16 %v423
  %v447 = vunpack.c.l.b16 %v424
  %v448 = vunpack.c.l.b16 %v425
  %v449 = vunpack.c.l.b16 %v426
  %v450 = vunpack.c.l.b16 %v427
  %v451 = vpack.c.b16 %v444, %v443
  %v452 = vpack.c.b16 %v446, %v445
  %v453 = vpack.c.b16 %v448, %v447
  %v454 = vpack.c.b16 %v450, %v449
  %vm459 = vcmask 523264
  %v461 = vsel %vm459, %v404, 0
  %v464 = vsel %vm459, %v405, 0
  %v467 = vsel %vm459, %v406, 0
  %v470 = vsel %vm459, %v407, 0
  %v473 = vsel %vm459, %v408, 0
  %v476 = vsel %vm459, %v409, 0
  %v479 = vsel %vm459, %v410, 0
  %v482 = vsel %vm459, %v411, 0
  %v485 = vsel %vm459, %v412, 0
  %v488 = vsel %vm459, %v413, 0
  %v491 = vsel %vm459, %v414, 0
  %v494 = vsel %vm459, %v415, 0
  %v497 = vsel %vm459, %v416, 0
  %v500 = vsel %vm459, %v417, 0
  %v503 = vsel %vm459, %v418, 0
  %v506 = vsel %vm459, %v419, 0
  %508 = vmatprep.subr.bf16.mxu0 0
  %509 = vmatpush1.bf16.msra.mxu0 %v451
  %510 = vmatprep.subr.bf16.mxu0 0
  %511 = vmatpush1.bf16.msra.mxu0 %v452
  %512 = vmatprep.subr.bf16.mxu0 0
  %513 = vmatpush1.bf16.msra.mxu0 %v453
  %514 = vmatprep.subr.bf16.mxu0 0
  %515 = vmatpush1.bf16.msra.mxu0 %v454
  %516 = vmatprep.subr.bf16.mxu0 0
  %517 = vmatpush1.bf16.msra.mxu0 0
  %518 = vmatprep.subr.bf16.mxu0 0
  %519 = vmatpush1.bf16.msra.mxu0 0
  %520 = vmatprep.subr.bf16.mxu0 0
  %521 = vmatpush1.bf16.msra.mxu0 0
  %522 = vmatprep.subr.bf16.mxu0 0
  %523 = vmatpush1.bf16.msra.mxu0 0
  %524 = vmatprep.subr.bf16.mxu0 0
  %525 = vmatpush1.bf16.msra.mxu0 0
  %526 = vmatprep.subr.bf16.mxu0 0
  %527 = vmatpush1.bf16.msra.mxu0 0
  %528 = vmatprep.subr.bf16.mxu0 0
  %529 = vmatpush1.bf16.msra.mxu0 0
  %530 = vmatprep.subr.bf16.mxu0 0
  %531 = vmatpush1.bf16.msra.mxu0 0
  %532 = vmatprep.subr.bf16.mxu0 0
  %533 = vmatpush1.bf16.msra.mxu0 0
  %534 = vmatprep.subr.bf16.mxu0 0
  %535 = vmatpush1.bf16.msra.mxu0 0
  %536 = vmatprep.subr.bf16.mxu0 0
  %537 = vmatpush1.bf16.msra.mxu0 0
  %538 = vmatprep.subr.bf16.mxu0 0
  %539 = vmatpush1.bf16.msra.mxu0 0
  %540 = vmatprep.mubr.bf16.mxu0 0
  %541 = vmatmul.mubr.bf16.gmra.mrb[0].mxu0 %v461
  %v542 = vpop.f32.mrb[0].mxu0
  %v543 = vadd.f32 %v433, %v542
  %v544 = vpop.f32.mrb[0].mxu0
  %v545 = vpop.f32.mrb[0].mxu0
  %v546 = vadd.f32 %v433, %v545
  %v547 = vpop.f32.mrb[0].mxu0
  %548 = vmatprep.mubr.bf16.mxu0 0
  %549 = vmatmul.mubr.bf16.gmra.mrb[0].mxu0 %v464
  %v550 = vpop.f32.mrb[0].mxu0
  %v551 = vadd.f32 %v433, %v550
  %v552 = vpop.f32.mrb[0].mxu0
  %v553 = vpop.f32.mrb[0].mxu0
  %v554 = vadd.f32 %v433, %v553
  %v555 = vpop.f32.mrb[0].mxu0
  %556 = vmatprep.mubr.bf16.mxu0 0
  %557 = vmatmul.mubr.bf16.gmra.mrb[0].mxu0 %v467
  %v558 = vpop.f32.mrb[0].mxu0
  %v559 = vadd.f32 %v433, %v558
  %v560 = vpop.f32.mrb[0].mxu0
  %v561 = vpop.f32.mrb[0].mxu0
  %v562 = vadd.f32 %v433, %v561
  %v563 = vpop.f32.mrb[0].mxu0
  %564 = vmatprep.mubr.bf16.mxu0 0
  %565 = vmatmul.mubr.bf16.gmra.mrb[0].mxu0 %v470
  %v566 = vpop.f32.mrb[0].mxu0
  %v567 = vadd.f32 %v433, %v566
  %v568 = vpop.f32.mrb[0].mxu0
  %v569 = vpop.f32.mrb[0].mxu0
  %v570 = vadd.f32 %v433, %v569
  %v571 = vpop.f32.mrb[0].mxu0
  %572 = vmatprep.mubr.bf16.mxu0 0
  %573 = vmatmul.mubr.bf16.gmra.mrb[0].mxu0 %v473
  %v574 = vpop.f32.mrb[0].mxu0
  %v575 = vadd.f32 %v433, %v574
  %v576 = vpop.f32.mrb[0].mxu0
  %v577 = vpop.f32.mrb[0].mxu0
  %v578 = vadd.f32 %v433, %v577
  %v579 = vpop.f32.mrb[0].mxu0
  %580 = vmatprep.mubr.bf16.mxu0 0
  %581 = vmatmul.mubr.bf16.gmra.mrb[0].mxu0 %v476
  %v582 = vpop.f32.mrb[0].mxu0
  %v583 = vadd.f32 %v433, %v582
  %v584 = vpop.f32.mrb[0].mxu0
  %v585 = vpop.f32.mrb[0].mxu0
  %v586 = vadd.f32 %v433, %v585
  %v587 = vpop.f32.mrb[0].mxu0
  %588 = vmatprep.mubr.bf16.mxu0 0
  %589 = vmatmul.mubr.bf16.gmra.mrb[0].mxu0 %v479
  %v590 = vpop.f32.mrb[0].mxu0
  %v591 = vadd.f32 %v433, %v590
  %v592 = vpop.f32.mrb[0].mxu0
  %v593 = vpop.f32.mrb[0].mxu0
  %v594 = vadd.f32 %v433, %v593
  %v595 = vpop.f32.mrb[0].mxu0
  %596 = vmatprep.mubr.bf16.mxu0 0
  %597 = vmatmul.mubr.bf16.gmra.mrb[0].mxu0 %v482
  %v598 = vpop.f32.mrb[0].mxu0
  %v599 = vadd.f32 %v433, %v598
  %v600 = vpop.f32.mrb[0].mxu0
  %v601 = vpop.f32.mrb[0].mxu0
  %v602 = vadd.f32 %v433, %v601
  %v603 = vpop.f32.mrb[0].mxu0
  %604 = vmatprep.mubr.bf16.mxu0 0
  %605 = vmatmul.mubr.bf16.gmra.mrb[0].mxu0 %v485
  %v606 = vpop.f32.mrb[0].mxu0
  %v607 = vadd.f32 %v433, %v606
  %v608 = vpop.f32.mrb[0].mxu0
  %v609 = vpop.f32.mrb[0].mxu0
  %v610 = vadd.f32 %v433, %v609
  %v611 = vpop.f32.mrb[0].mxu0
  %612 = vmatprep.mubr.bf16.mxu0 0
  %613 = vmatmul.mubr.bf16.gmra.mrb[0].mxu0 %v488
  %v614 = vpop.f32.mrb[0].mxu0
  %v615 = vadd.f32 %v433, %v614
  %v616 = vpop.f32.mrb[0].mxu0
  %v617 = vpop.f32.mrb[0].mxu0
  %v618 = vadd.f32 %v433, %v617
  %v619 = vpop.f32.mrb[0].mxu0
  %620 = vmatprep.mubr.bf16.mxu0 0
  %621 = vmatmul.mubr.bf16.gmra.mrb[0].mxu0 %v491
  %v622 = vpop.f32.mrb[0].mxu0
  %v623 = vadd.f32 %v433, %v622
  %v624 = vpop.f32.mrb[0].mxu0
  %v625 = vpop.f32.mrb[0].mxu0
  %v626 = vadd.f32 %v433, %v625
  %v627 = vpop.f32.mrb[0].mxu0
  %628 = vmatprep.mubr.bf16.mxu0 0
  %629 = vmatmul.mubr.bf16.gmra.mrb[0].mxu0 %v494
  %v630 = vpop.f32.mrb[0].mxu0
  %v631 = vadd.f32 %v433, %v630
  %v632 = vpop.f32.mrb[0].mxu0
  %v633 = vpop.f32.mrb[0].mxu0
  %v634 = vadd.f32 %v433, %v633
  %v635 = vpop.f32.mrb[0].mxu0
  %636 = vmatprep.mubr.bf16.mxu0 0
  %637 = vmatmul.mubr.bf16.gmra.mrb[0].mxu0 %v497
  %v638 = vpop.f32.mrb[0].mxu0
  %v639 = vadd.f32 %v433, %v638
  %v640 = vpop.f32.mrb[0].mxu0
  %v641 = vpop.f32.mrb[0].mxu0
  %v642 = vadd.f32 %v433, %v641
  %v643 = vpop.f32.mrb[0].mxu0
  %644 = vmatprep.mubr.bf16.mxu0 0
  %645 = vmatmul.mubr.bf16.gmra.mrb[0].mxu0 %v500
  %v646 = vpop.f32.mrb[0].mxu0
  %v647 = vadd.f32 %v433, %v646
  %v648 = vpop.f32.mrb[0].mxu0
  %v649 = vpop.f32.mrb[0].mxu0
  %v650 = vadd.f32 %v433, %v649
  %v651 = vpop.f32.mrb[0].mxu0
  %652 = vmatprep.mubr.bf16.mxu0 0
  %653 = vmatmul.mubr.bf16.gmra.mrb[0].mxu0 %v503
  %v654 = vpop.f32.mrb[0].mxu0
  %v655 = vadd.f32 %v433, %v654
  %v656 = vpop.f32.mrb[0].mxu0
  %v657 = vpop.f32.mrb[0].mxu0
  %v658 = vadd.f32 %v433, %v657
  %v659 = vpop.f32.mrb[0].mxu0
  %660 = vmatprep.mubr.bf16.mxu0 0
  %661 = vmatmul.mubr.bf16.gmra.mrb[0].mxu0 %v506
  %v662 = vpop.f32.mrb[0].mxu0
  %v663 = vadd.f32 %v433, %v662
  %v664 = vpop.f32.mrb[0].mxu0
  %v665 = vpop.f32.mrb[0].mxu0
  %v666 = vadd.f32 %v433, %v665
  %v667 = vpop.f32.mrb[0].mxu0
  %668 = vdwg.mxu0
  %v669 = vmax.f32 %v543, 0.0
  %v670 = vmax.f32 %v546, 0.0
  %v671 = vmax.f32 %v551, 0.0
  %v672 = vmax.f32 %v554, 0.0
  %v673 = vmax.f32 %v559, 0.0
  %v674 = vmax.f32 %v562, 0.0
  %v675 = vmax.f32 %v567, 0.0
  %v676 = vmax.f32 %v570, 0.0
  %v677 = vmax.f32 %v575, 0.0
  %v678 = vmax.f32 %v578, 0.0
  %v679 = vmax.f32 %v583, 0.0
  %v680 = vmax.f32 %v586, 0.0
  %v681 = vmax.f32 %v591, 0.0
  %v682 = vmax.f32 %v594, 0.0
  %v683 = vmax.f32 %v599, 0.0
  %v684 = vmax.f32 %v602, 0.0
  %v685 = vmax.f32 %v607, 0.0
  %v686 = vmax.f32 %v610, 0.0
  %v687 = vmax.f32 %v615, 0.0
  %v688 = vmax.f32 %v618, 0.0
  %v689 = vmax.f32 %v623, 0.0
  %v690 = vmax.f32 %v626, 0.0
  %v691 = vmax.f32 %v631, 0.0
  %v692 = vmax.f32 %v634, 0.0
  %v693 = vmax.f32 %v639, 0.0
  %v694 = vmax.f32 %v642, 0.0
  %v695 = vmax.f32 %v647, 0.0
  %v696 = vmax.f32 %v650, 0.0
  %v697 = vmax.f32 %v655, 0.0
  %v698 = vmax.f32 %v658, 0.0
  %v699 = vmax.f32 %v663, 0.0
  %v700 = vmax.f32 %v666, 0.0
  %v701 = vpack.c.bf16 %v670, %v669
  %v702 = vpack.c.bf16 %v672, %v671
  %v703 = vpack.c.bf16 %v674, %v673
  %v704 = vpack.c.bf16 %v676, %v675
  %v705 = vpack.c.bf16 %v678, %v677
  %v706 = vpack.c.bf16 %v680, %v679
  %v707 = vpack.c.bf16 %v682, %v681
  %v708 = vpack.c.bf16 %v684, %v683
  %v709 = vpack.c.bf16 %v686, %v685
  %v710 = vpack.c.bf16 %v688, %v687
  %v711 = vpack.c.bf16 %v690, %v689
  %v712 = vpack.c.bf16 %v692, %v691
  %v713 = vpack.c.bf16 %v694, %v693
  %v714 = vpack.c.bf16 %v696, %v695
  %v715 = vpack.c.bf16 %v698, %v697
  %v716 = vpack.c.bf16 %v700, %v699
  %v717 = vld [vmem:[%s5] sm:$0xf]
  %v718 = vld [vmem:[%s5 + $0x4] sm:$0xf]
  %v719 = vld [vmem:[%s5 + $0x8] sm:$0xf]
  %v720 = vld [vmem:[%s5 + $0xc] sm:$0xf]
  %v721 = vld [vmem:[%s6] sm:$0x1]
  %v723 = vlaneseq
  %v724 = vshrl.u32 %v723, 7
  %v725 = vsub.s32 0, %v724
  %v726 = vrot.slane %v721, %v725
  %v732 = vunpack.c.l.b16 %v717
  %v733 = vunpack.c.l.b16 %v718
  %v734 = vunpack.c.l.b16 %v719
  %v735 = vunpack.c.l.b16 %v720
  %v736 = vpack.c.b16 %v733, %v732
  %v737 = vpack.c.b16 %v735, %v734
  %v741 = vsel %vm162, %v701, 0
  %v744 = vsel %vm162, %v702, 0
  %v747 = vsel %vm162, %v703, 0
  %v750 = vsel %vm162, %v704, 0
  %v753 = vsel %vm162, %v705, 0
  %v756 = vsel %vm162, %v706, 0
  %v759 = vsel %vm162, %v707, 0
  %v762 = vsel %vm162, %v708, 0
  %v765 = vsel %vm162, %v709, 0
  %v768 = vsel %vm162, %v710, 0
  %v771 = vsel %vm162, %v711, 0
  %v774 = vsel %vm162, %v712, 0
  %v777 = vsel %vm162, %v713, 0
  %v780 = vsel %vm162, %v714, 0
  %v783 = vsel %vm162, %v715, 0
  %v786 = vsel %vm162, %v716, 0
  %788 = vmatprep.subr.bf16.mxu0 0
  %789 = vmatpush1.bf16.msra.mxu0 %v736
  %790 = vmatprep.subr.bf16.mxu0 0
  %791 = vmatpush1.bf16.msra.mxu0 %v737
  %792 = vmatprep.subr.bf16.mxu0 0
  %793 = vmatpush1.bf16.msra.mxu0 0
  %794 = vmatprep.subr.bf16.mxu0 0
  %795 = vmatpush1.bf16.msra.mxu0 0
  %796 = vmatprep.subr.bf16.mxu0 0
  %797 = vmatpush1.bf16.msra.mxu0 0
  %798 = vmatprep.subr.bf16.mxu0 0
  %799 = vmatpush1.bf16.msra.mxu0 0
  %800 = vmatprep.subr.bf16.mxu0 0
  %801 = vmatpush1.bf16.msra.mxu0 0
  %802 = vmatprep.subr.bf16.mxu0 0
  %803 = vmatpush1.bf16.msra.mxu0 0
  %804 = vmatprep.subr.bf16.mxu0 0
  %805 = vmatpush1.bf16.msra.mxu0 0
  %806 = vmatprep.subr.bf16.mxu0 0
  %807 = vmatpush1.bf16.msra.mxu0 0
  %808 = vmatprep.subr.bf16.mxu0 0
  %809 = vmatpush1.bf16.msra.mxu0 0
  %810 = vmatprep.subr.bf16.mxu0 0
  %811 = vmatpush1.bf16.msra.mxu0 0
  %812 = vmatprep.subr.bf16.mxu0 0
  %813 = vmatpush1.bf16.msra.mxu0 0
  %814 = vmatprep.subr.bf16.mxu0 0
  %815 = vmatpush1.bf16.msra.mxu0 0
  %816 = vmatprep.subr.bf16.mxu0 0
  %817 = vmatpush1.bf16.msra.mxu0 0
  %818 = vmatprep.subr.bf16.mxu0 0
  %819 = vmatpush1.bf16.msra.mxu0 0
  %820 = vmatprep.mubr.bf16.mxu0 0
  %821 = vmatmul.mubr.bf16.gmra.mrb[0].mxu0 %v741
  %v822 = vpop.f32.mrb[0].mxu0
  %v823 = vadd.f32 %v726, %v822
  %v824 = vpop.f32.mrb[0].mxu0
  %v825 = vpop.f32.mrb[0].mxu0
  %v826 = vadd.f32 %v726, %v825
  %v827 = vpop.f32.mrb[0].mxu0
  %828 = vmatprep.mubr.bf16.mxu0 0
  %829 = vmatmul.mubr.bf16.gmra.mrb[0].mxu0 %v744
  %v830 = vpop.f32.mrb[0].mxu0
  %v831 = vadd.f32 %v726, %v830
  %v832 = vpop.f32.mrb[0].mxu0
  %v833 = vpop.f32.mrb[0].mxu0
  %v834 = vadd.f32 %v726, %v833
  %v835 = vpop.f32.mrb[0].mxu0
  %836 = vmatprep.mubr.bf16.mxu0 0
  %837 = vmatmul.mubr.bf16.gmra.mrb[0].mxu0 %v747
  %v838 = vpop.f32.mrb[0].mxu0
  %v839 = vadd.f32 %v726, %v838
  %v840 = vpop.f32.mrb[0].mxu0
  %v841 = vpop.f32.mrb[0].mxu0
  %v842 = vadd.f32 %v726, %v841
  %v843 = vpop.f32.mrb[0].mxu0
  %844 = vmatprep.mubr.bf16.mxu0 0
  %845 = vmatmul.mubr.bf16.gmra.mrb[0].mxu0 %v750
  %v846 = vpop.f32.mrb[0].mxu0
  %v847 = vadd.f32 %v726, %v846
  %v848 = vpop.f32.mrb[0].mxu0
  %v849 = vpop.f32.mrb[0].mxu0
  %v850 = vadd.f32 %v726, %v849
  %v851 = vpop.f32.mrb[0].mxu0
  %852 = vmatprep.mubr.bf16.mxu0 0
  %853 = vmatmul.mubr.bf16.gmra.mrb[0].mxu0 %v753
  %v854 = vpop.f32.mrb[0].mxu0
  %v855 = vadd.f32 %v726, %v854
  %v856 = vpop.f32.mrb[0].mxu0
  %v857 = vpop.f32.mrb[0].mxu0
  %v858 = vadd.f32 %v726, %v857
  %v859 = vpop.f32.mrb[0].mxu0
  %860 = vmatprep.mubr.bf16.mxu0 0
  %861 = vmatmul.mubr.bf16.gmra.mrb[0].mxu0 %v756
  %v862 = vpop.f32.mrb[0].mxu0
  %v863 = vadd.f32 %v726, %v862
  %v864 = vpop.f32.mrb[0].mxu0
  %v865 = vpop.f32.mrb[0].mxu0
  %v866 = vadd.f32 %v726, %v865
  %v867 = vpop.f32.mrb[0].mxu0
  %868 = vmatprep.mubr.bf16.mxu0 0
  %869 = vmatmul.mubr.bf16.gmra.mrb[0].mxu0 %v759
  %v870 = vpop.f32.mrb[0].mxu0
  %v871 = vadd.f32 %v726, %v870
  %v872 = vpop.f32.mrb[0].mxu0
  %v873 = vpop.f32.mrb[0].mxu0
  %v874 = vadd.f32 %v726, %v873
  %v875 = vpop.f32.mrb[0].mxu0
  %876 = vmatprep.mubr.bf16.mxu0 0
  %877 = vmatmul.mubr.bf16.gmra.mrb[0].mxu0 %v762
  %v878 = vpop.f32.mrb[0].mxu0
  %v879 = vadd.f32 %v726, %v878
  %v880 = vpop.f32.mrb[0].mxu0
  %v881 = vpop.f32.mrb[0].mxu0
  %v882 = vadd.f32 %v726, %v881
  %v883 = vpop.f32.mrb[0].mxu0
  %884 = vmatprep.mubr.bf16.mxu0 0
  %885 = vmatmul.mubr.bf16.gmra.mrb[0].mxu0 %v765
  %v886 = vpop.f32.mrb[0].mxu0
  %v887 = vadd.f32 %v726, %v886
  %v888 = vpop.f32.mrb[0].mxu0
  %v889 = vpop.f32.mrb[0].mxu0
  %v890 = vadd.f32 %v726, %v889
  %v891 = vpop.f32.mrb[0].mxu0
  %892 = vmatprep.mubr.bf16.mxu0 0
  %893 = vmatmul.mubr.bf16.gmra.mrb[0].mxu0 %v768
  %v894 = vpop.f32.mrb[0].mxu0
  %v895 = vadd.f32 %v726, %v894
  %v896 = vpop.f32.mrb[0].mxu0
  %v897 = vpop.f32.mrb[0].mxu0
  %v898 = vadd.f32 %v726, %v897
  %v899 = vpop.f32.mrb[0].mxu0
  %900 = vmatprep.mubr.bf16.mxu0 0
  %901 = vmatmul.mubr.bf16.gmra.mrb[0].mxu0 %v771
  %v902 = vpop.f32.mrb[0].mxu0
  %v903 = vadd.f32 %v726, %v902
  %v904 = vpop.f32.mrb[0].mxu0
  %v905 = vpop.f32.mrb[0].mxu0
  %v906 = vadd.f32 %v726, %v905
  %v907 = vpop.f32.mrb[0].mxu0
  %908 = vmatprep.mubr.bf16.mxu0 0
  %909 = vmatmul.mubr.bf16.gmra.mrb[0].mxu0 %v774
  %v910 = vpop.f32.mrb[0].mxu0
  %v911 = vadd.f32 %v726, %v910
  %v912 = vpop.f32.mrb[0].mxu0
  %v913 = vpop.f32.mrb[0].mxu0
  %v914 = vadd.f32 %v726, %v913
  %v915 = vpop.f32.mrb[0].mxu0
  %916 = vmatprep.mubr.bf16.mxu0 0
  %917 = vmatmul.mubr.bf16.gmra.mrb[0].mxu0 %v777
  %v918 = vpop.f32.mrb[0].mxu0
  %v919 = vadd.f32 %v726, %v918
  %v920 = vpop.f32.mrb[0].mxu0
  %v921 = vpop.f32.mrb[0].mxu0
  %v922 = vadd.f32 %v726, %v921
  %v923 = vpop.f32.mrb[0].mxu0
  %924 = vmatprep.mubr.bf16.mxu0 0
  %925 = vmatmul.mubr.bf16.gmra.mrb[0].mxu0 %v780
  %v926 = vpop.f32.mrb[0].mxu0
  %v927 = vadd.f32 %v726, %v926
  %v928 = vpop.f32.mrb[0].mxu0
  %v929 = vpop.f32.mrb[0].mxu0
  %v930 = vadd.f32 %v726, %v929
  %v931 = vpop.f32.mrb[0].mxu0
  %932 = vmatprep.mubr.bf16.mxu0 0
  %933 = vmatmul.mubr.bf16.gmra.mrb[0].mxu0 %v783
  %v934 = vpop.f32.mrb[0].mxu0
  %v935 = vadd.f32 %v726, %v934
  %v936 = vpop.f32.mrb[0].mxu0
  %v937 = vpop.f32.mrb[0].mxu0
  %v938 = vadd.f32 %v726, %v937
  %v939 = vpop.f32.mrb[0].mxu0
  %940 = vmatprep.mubr.bf16.mxu0 0
  %941 = vmatmul.mubr.bf16.gmra.mrb[0].mxu0 %v786
  %v942 = vpop.f32.mrb[0].mxu0
  %v943 = vadd.f32 %v726, %v942
  %v944 = vpop.f32.mrb[0].mxu0
  %v945 = vpop.f32.mrb[0].mxu0
  %v946 = vadd.f32 %v726, %v945
  %v947 = vpop.f32.mrb[0].mxu0
  %948 = vdwg.mxu0
  %vm949 = vcmask 64512
  %v950 = vsel %vm949, %v823, -inf
  %951 = vmax.xlane.f32.xlu0 %v950
  %v952 = vpop.xlane.xlu0 %951
  %v953 = vsel %vm949, %v826, -inf
  %954 = vmax.xlane.f32.xlu0 %v953
  %v955 = vpop.xlane.xlu0 %954
  %v956 = vsel %vm949, %v831, -inf
  %957 = vmax.xlane.f32.xlu0 %v956
  %v958 = vpop.xlane.xlu0 %957
  %v959 = vsel %vm949, %v834, -inf
  %960 = vmax.xlane.f32.xlu0 %v959
  %v961 = vpop.xlane.xlu0 %960
  %v962 = vsel %vm949, %v839, -inf
  %963 = vmax.xlane.f32.xlu0 %v962
  %v964 = vpop.xlane.xlu0 %963
  %v965 = vsel %vm949, %v842, -inf
  %966 = vmax.xlane.f32.xlu0 %v965
  %v967 = vpop.xlane.xlu0 %966
  %v968 = vsel %vm949, %v847, -inf
  %969 = vmax.xlane.f32.xlu0 %v968
  %v970 = vpop.xlane.xlu0 %969
  %v971 = vsel %vm949, %v850, -inf
  %972 = vmax.xlane.f32.xlu0 %v971
  %v973 = vpop.xlane.xlu0 %972
  %v974 = vsel %vm949, %v855, -inf
  %975 = vmax.xlane.f32.xlu0 %v974
  %v976 = vpop.xlane.xlu0 %975
  %v977 = vsel %vm949, %v858, -inf
  %978 = vmax.xlane.f32.xlu0 %v977
  %v979 = vpop.xlane.xlu0 %978
  %v980 = vsel %vm949, %v863, -inf
  %981 = vmax.xlane.f32.xlu0 %v980
  %v982 = vpop.xlane.xlu0 %981
  %v983 = vsel %vm949, %v866, -inf
  %984 = vmax.xlane.f32.xlu0 %v983
  %v985 = vpop.xlane.xlu0 %984
  %v986 = vsel %vm949, %v871, -inf
  %987 = vmax.xlane.f32.xlu0 %v986
  %v988 = vpop.xlane.xlu0 %987
  %v989 = vsel %vm949, %v874, -inf
  %990 = vmax.xlane.f32.xlu0 %v989
  %v991 = vpop.xlane.xlu0 %990
  %v992 = vsel %vm949, %v879, -inf
  %993 = vmax.xlane.f32.xlu0 %v992
  %v994 = vpop.xlane.xlu0 %993
  %v995 = vsel %vm949, %v882, -inf
  %996 = vmax.xlane.f32.xlu0 %v995
  %v997 = vpop.xlane.xlu0 %996
  %v998 = vsel %vm949, %v887, -inf
  %999 = vmax.xlane.f32.xlu0 %v998
  %v1000 = vpop.xlane.xlu0 %999
  %v1001 = vsel %vm949, %v890, -inf
  %1002 = vmax.xlane.f32.xlu0 %v1001
  %v1003 = vpop.xlane.xlu0 %1002
  %v1004 = vsel %vm949, %v895, -inf
  %1005 = vmax.xlane.f32.xlu0 %v1004
  %v1006 = vpop.xlane.xlu0 %1005
  %v1007 = vsel %vm949, %v898, -inf
  %1008 = vmax.xlane.f32.xlu0 %v1007
  %v1009 = vpop.xlane.xlu0 %1008
  %v1010 = vsel %vm949, %v903, -inf
  %1011 = vmax.xlane.f32.xlu0 %v1010
  %v1012 = vpop.xlane.xlu0 %1011
  %v1013 = vsel %vm949, %v906, -inf
  %1014 = vmax.xlane.f32.xlu0 %v1013
  %v1015 = vpop.xlane.xlu0 %1014
  %v1016 = vsel %vm949, %v911, -inf
  %1017 = vmax.xlane.f32.xlu0 %v1016
  %v1018 = vpop.xlane.xlu0 %1017
  %v1019 = vsel %vm949, %v914, -inf
  %1020 = vmax.xlane.f32.xlu0 %v1019
  %v1021 = vpop.xlane.xlu0 %1020
  %v1022 = vsel %vm949, %v919, -inf
  %1023 = vmax.xlane.f32.xlu0 %v1022
  %v1024 = vpop.xlane.xlu0 %1023
  %v1025 = vsel %vm949, %v922, -inf
  %1026 = vmax.xlane.f32.xlu0 %v1025
  %v1027 = vpop.xlane.xlu0 %1026
  %v1028 = vsel %vm949, %v927, -inf
  %1029 = vmax.xlane.f32.xlu0 %v1028
  %v1030 = vpop.xlane.xlu0 %1029
  %v1031 = vsel %vm949, %v930, -inf
  %1032 = vmax.xlane.f32.xlu0 %v1031
  %v1033 = vpop.xlane.xlu0 %1032
  %v1034 = vsel %vm949, %v935, -inf
  %1035 = vmax.xlane.f32.xlu0 %v1034
  %v1036 = vpop.xlane.xlu0 %1035
  %v1037 = vsel %vm949, %v938, -inf
  %1038 = vmax.xlane.f32.xlu0 %v1037
  %v1039 = vpop.xlane.xlu0 %1038
  %v1040 = vsel %vm949, %v943, -inf
  %1041 = vmax.xlane.f32.xlu0 %v1040
  %v1042 = vpop.xlane.xlu0 %1041
  %v1043 = vsel %vm949, %v946, -inf
  %1044 = vmax.xlane.f32.xlu0 %v1043
  %v1045 = vpop.xlane.xlu0 %1044
  %v1046 = vsub.f32 %v823, %v952
  %v1047 = vsub.f32 %v826, %v955
  %v1048 = vsub.f32 %v831, %v958
  %v1049 = vsub.f32 %v834, %v961
  %v1050 = vsub.f32 %v839, %v964
  %v1051 = vsub.f32 %v842, %v967
  %v1052 = vsub.f32 %v847, %v970
  %v1053 = vsub.f32 %v850, %v973
  %v1054 = vsub.f32 %v855, %v976
  %v1055 = vsub.f32 %v858, %v979
  %v1056 = vsub.f32 %v863, %v982
  %v1057 = vsub.f32 %v866, %v985
  %v1058 = vsub.f32 %v871, %v988
  %v1059 = vsub.f32 %v874, %v991
  %v1060 = vsub.f32 %v879, %v994
  %v1061 = vsub.f32 %v882, %v997
  %v1062 = vsub.f32 %v887, %v1000
  %v1063 = vsub.f32 %v890, %v1003
  %v1064 = vsub.f32 %v895, %v1006
  %v1065 = vsub.f32 %v898, %v1009
  %v1066 = vsub.f32 %v903, %v1012
  %v1067 = vsub.f32 %v906, %v1015
  %v1068 = vsub.f32 %v911, %v1018
  %v1069 = vsub.f32 %v914, %v1021
  %v1070 = vsub.f32 %v919, %v1024
  %v1071 = vsub.f32 %v922, %v1027
  %v1072 = vsub.f32 %v927, %v1030
  %v1073 = vsub.f32 %v930, %v1033
  %v1074 = vsub.f32 %v935, %v1036
  %v1075 = vsub.f32 %v938, %v1039
  %v1076 = vsub.f32 %v943, %v1042
  %v1077 = vsub.f32 %v946, %v1045
  %v1078 = vmul.f32 %v1046, 1.442695
  %v1079 = vpow.pop %v1078
  %v1080 = vmul.f32 %v1047, 1.442695
  %v1081 = vpow.pop %v1080
  %v1082 = vmul.f32 %v1048, 1.442695
  %v1083 = vpow.pop %v1082
  %v1084 = vmul.f32 %v1049, 1.442695
  %v1085 = vpow.pop %v1084
  %v1086 = vmul.f32 %v1050, 1.442695
  %v1087 = vpow.pop %v1086
  %v1088 = vmul.f32 %v1051, 1.442695
  %v1089 = vpow.pop %v1088
  %v1090 = vmul.f32 %v1052, 1.442695
  %v1091 = vpow.pop %v1090
  %v1092 = vmul.f32 %v1053, 1.442695
  %v1093 = vpow.pop %v1092
  %v1094 = vmul.f32 %v1054, 1.442695
  %v1095 = vpow.pop %v1094
  %v1096 = vmul.f32 %v1055, 1.442695
  %v1097 = vpow.pop %v1096
  %v1098 = vmul.f32 %v1056, 1.442695
  %v1099 = vpow.pop %v1098
  %v1100 = vmul.f32 %v1057, 1.442695
  %v1101 = vpow.pop %v1100
  %v1102 = vmul.f32 %v1058, 1.442695
  %v1103 = vpow.pop %v1102
  %v1104 = vmul.f32 %v1059, 1.442695
  %v1105 = vpow.pop %v1104
  %v1106 = vmul.f32 %v1060, 1.442695
  %v1107 = vpow.pop %v1106
  %v1108 = vmul.f32 %v1061, 1.442695
  %v1109 = vpow.pop %v1108
  %v1110 = vmul.f32 %v1062, 1.442695
  %v1111 = vpow.pop %v1110
  %v1112 = vmul.f32 %v1063, 1.442695
  %v1113 = vpow.pop %v1112
  %v1114 = vmul.f32 %v1064, 1.442695
  %v1115 = vpow.pop %v1114
  %v1116 = vmul.f32 %v1065, 1.442695
  %v1117 = vpow.pop %v1116
  %v1118 = vmul.f32 %v1066, 1.442695
  %v1119 = vpow.pop %v1118
  %v1120 = vmul.f32 %v1067, 1.442695
  %v1121 = vpow.pop %v1120
  %v1122 = vmul.f32 %v1068, 1.442695
  %v1123 = vpow.pop %v1122
  %v1124 = vmul.f32 %v1069, 1.442695
  %v1125 = vpow.pop %v1124
  %v1126 = vmul.f32 %v1070, 1.442695
  %v1127 = vpow.pop %v1126
  %v1128 = vmul.f32 %v1071, 1.442695
  %v1129 = vpow.pop %v1128
  %v1130 = vmul.f32 %v1072, 1.442695
  %v1131 = vpow.pop %v1130
  %v1132 = vmul.f32 %v1073, 1.442695
  %v1133 = vpow.pop %v1132
  %v1134 = vmul.f32 %v1074, 1.442695
  %v1135 = vpow.pop %v1134
  %v1136 = vmul.f32 %v1075, 1.442695
  %v1137 = vpow.pop %v1136
  %v1138 = vmul.f32 %v1076, 1.442695
  %v1139 = vpow.pop %v1138
  %v1140 = vmul.f32 %v1077, 1.442695
  %v1141 = vpow.pop %v1140
  %v1142 = vsel %vm949, %v1079, 0.0
  %1143 = vadd.xlane.f32.xlu0 %v1142
  %v1144 = vpop.xlane.xlu0 %1143
  %v1145 = vsel %vm949, %v1081, 0.0
  %1146 = vadd.xlane.f32.xlu0 %v1145
  %v1147 = vpop.xlane.xlu0 %1146
  %v1148 = vsel %vm949, %v1083, 0.0
  %1149 = vadd.xlane.f32.xlu0 %v1148
  %v1150 = vpop.xlane.xlu0 %1149
  %v1151 = vsel %vm949, %v1085, 0.0
  %1152 = vadd.xlane.f32.xlu0 %v1151
  %v1153 = vpop.xlane.xlu0 %1152
  %v1154 = vsel %vm949, %v1087, 0.0
  %1155 = vadd.xlane.f32.xlu0 %v1154
  %v1156 = vpop.xlane.xlu0 %1155
  %v1157 = vsel %vm949, %v1089, 0.0
  %1158 = vadd.xlane.f32.xlu0 %v1157
  %v1159 = vpop.xlane.xlu0 %1158
  %v1160 = vsel %vm949, %v1091, 0.0
  %1161 = vadd.xlane.f32.xlu0 %v1160
  %v1162 = vpop.xlane.xlu0 %1161
  %v1163 = vsel %vm949, %v1093, 0.0
  %1164 = vadd.xlane.f32.xlu0 %v1163
  %v1165 = vpop.xlane.xlu0 %1164
  %v1166 = vsel %vm949, %v1095, 0.0
  %1167 = vadd.xlane.f32.xlu0 %v1166
  %v1168 = vpop.xlane.xlu0 %1167
  %v1169 = vsel %vm949, %v1097, 0.0
  %1170 = vadd.xlane.f32.xlu0 %v1169
  %v1171 = vpop.xlane.xlu0 %1170
  %v1172 = vsel %vm949, %v1099, 0.0
  %1173 = vadd.xlane.f32.xlu0 %v1172
  %v1174 = vpop.xlane.xlu0 %1173
  %v1175 = vsel %vm949, %v1101, 0.0
  %1176 = vadd.xlane.f32.xlu0 %v1175
  %v1177 = vpop.xlane.xlu0 %1176
  %v1178 = vsel %vm949, %v1103, 0.0
  %1179 = vadd.xlane.f32.xlu0 %v1178
  %v1180 = vpop.xlane.xlu0 %1179
  %v1181 = vsel %vm949, %v1105, 0.0
  %1182 = vadd.xlane.f32.xlu0 %v1181
  %v1183 = vpop.xlane.xlu0 %1182
  %v1184 = vsel %vm949, %v1107, 0.0
  %1185 = vadd.xlane.f32.xlu0 %v1184
  %v1186 = vpop.xlane.xlu0 %1185
  %v1187 = vsel %vm949, %v1109, 0.0
  %1188 = vadd.xlane.f32.xlu0 %v1187
  %v1189 = vpop.xlane.xlu0 %1188
  %v1190 = vsel %vm949, %v1111, 0.0
  %1191 = vadd.xlane.f32.xlu0 %v1190
  %v1192 = vpop.xlane.xlu0 %1191
  %v1193 = vsel %vm949, %v1113, 0.0
  %1194 = vadd.xlane.f32.xlu0 %v1193
  %v1195 = vpop.xlane.xlu0 %1194
  %v1196 = vsel %vm949, %v1115, 0.0
  %1197 = vadd.xlane.f32.xlu0 %v1196
  %v1198 = vpop.xlane.xlu0 %1197
  %v1199 = vsel %vm949, %v1117, 0.0
  %1200 = vadd.xlane.f32.xlu0 %v1199
  %v1201 = vpop.xlane.xlu0 %1200
  %v1202 = vsel %vm949, %v1119, 0.0
  %1203 = vadd.xlane.f32.xlu0 %v1202
  %v1204 = vpop.xlane.xlu0 %1203
  %v1205 = vsel %vm949, %v1121, 0.0
  %1206 = vadd.xlane.f32.xlu0 %v1205
  %v1207 = vpop.xlane.xlu0 %1206
  %v1208 = vsel %vm949, %v1123, 0.0
  %1209 = vadd.xlane.f32.xlu0 %v1208
  %v1210 = vpop.xlane.xlu0 %1209
  %v1211 = vsel %vm949, %v1125, 0.0
  %1212 = vadd.xlane.f32.xlu0 %v1211
  %v1213 = vpop.xlane.xlu0 %1212
  %v1214 = vsel %vm949, %v1127, 0.0
  %1215 = vadd.xlane.f32.xlu0 %v1214
  %v1216 = vpop.xlane.xlu0 %1215
  %v1217 = vsel %vm949, %v1129, 0.0
  %1218 = vadd.xlane.f32.xlu0 %v1217
  %v1219 = vpop.xlane.xlu0 %1218
  %v1220 = vsel %vm949, %v1131, 0.0
  %1221 = vadd.xlane.f32.xlu0 %v1220
  %v1222 = vpop.xlane.xlu0 %1221
  %v1223 = vsel %vm949, %v1133, 0.0
  %1224 = vadd.xlane.f32.xlu0 %v1223
  %v1225 = vpop.xlane.xlu0 %1224
  %v1226 = vsel %vm949, %v1135, 0.0
  %1227 = vadd.xlane.f32.xlu0 %v1226
  %v1228 = vpop.xlane.xlu0 %1227
  %v1229 = vsel %vm949, %v1137, 0.0
  %1230 = vadd.xlane.f32.xlu0 %v1229
  %v1231 = vpop.xlane.xlu0 %1230
  %v1232 = vsel %vm949, %v1139, 0.0
  %1233 = vadd.xlane.f32.xlu0 %v1232
  %v1234 = vpop.xlane.xlu0 %1233
  %v1235 = vsel %vm949, %v1141, 0.0
  %1236 = vadd.xlane.f32.xlu0 %v1235
  %v1237 = vpop.xlane.xlu0 %1236
  %v1238 = vlog2.pop %v1144
  %v1239 = vmul.f32 %v1238, 0.6931472
  %v1240 = vlog2.pop %v1147
  %v1241 = vmul.f32 %v1240, 0.6931472
  %v1242 = vlog2.pop %v1150
  %v1243 = vmul.f32 %v1242, 0.6931472
  %v1244 = vlog2.pop %v1153
  %v1245 = vmul.f32 %v1244, 0.6931472
  %v1246 = vlog2.pop %v1156
  %v1247 = vmul.f32 %v1246, 0.6931472
  %v1248 = vlog2.pop %v1159
  %v1249 = vmul.f32 %v1248, 0.6931472
  %v1250 = vlog2.pop %v1162
  %v1251 = vmul.f32 %v1250, 0.6931472
  %v1252 = vlog2.pop %v1165
  %v1253 = vmul.f32 %v1252, 0.6931472
  %v1254 = vlog2.pop %v1168
  %v1255 = vmul.f32 %v1254, 0.6931472
  %v1256 = vlog2.pop %v1171
  %v1257 = vmul.f32 %v1256, 0.6931472
  %v1258 = vlog2.pop %v1174
  %v1259 = vmul.f32 %v1258, 0.6931472
  %v1260 = vlog2.pop %v1177
  %v1261 = vmul.f32 %v1260, 0.6931472
  %v1262 = vlog2.pop %v1180
  %v1263 = vmul.f32 %v1262, 0.6931472
  %v1264 = vlog2.pop %v1183
  %v1265 = vmul.f32 %v1264, 0.6931472
  %v1266 = vlog2.pop %v1186
  %v1267 = vmul.f32 %v1266, 0.6931472
  %v1268 = vlog2.pop %v1189
  %v1269 = vmul.f32 %v1268, 0.6931472
  %v1270 = vlog2.pop %v1192
  %v1271 = vmul.f32 %v1270, 0.6931472
  %v1272 = vlog2.pop %v1195
  %v1273 = vmul.f32 %v1272, 0.6931472
  %v1274 = vlog2.pop %v1198
  %v1275 = vmul.f32 %v1274, 0.6931472
  %v1276 = vlog2.pop %v1201
  %v1277 = vmul.f32 %v1276, 0.6931472
  %v1278 = vlog2.pop %v1204
  %v1279 = vmul.f32 %v1278, 0.6931472
  %v1280 = vlog2.pop %v1207
  %v1281 = vmul.f32 %v1280, 0.6931472
  %v1282 = vlog2.pop %v1210
  %v1283 = vmul.f32 %v1282, 0.6931472
  %v1284 = vlog2.pop %v1213
  %v1285 = vmul.f32 %v1284, 0.6931472
  %v1286 = vlog2.pop %v1216
  %v1287 = vmul.f32 %v1286, 0.6931472
  %v1288 = vlog2.pop %v1219
  %v1289 = vmul.f32 %v1288, 0.6931472
  %v1290 = vlog2.pop %v1222
  %v1291 = vmul.f32 %v1290, 0.6931472
  %v1292 = vlog2.pop %v1225
  %v1293 = vmul.f32 %v1292, 0.6931472
  %v1294 = vlog2.pop %v1228
  %v1295 = vmul.f32 %v1294, 0.6931472
  %v1296 = vlog2.pop %v1231
  %v1297 = vmul.f32 %v1296, 0.6931472
  %v1298 = vlog2.pop %v1234
  %v1299 = vmul.f32 %v1298, 0.6931472
  %v1300 = vlog2.pop %v1237
  %v1301 = vmul.f32 %v1300, 0.6931472
  %v1302 = vsub.f32 %v1046, %v1239
  %v1303 = vsub.f32 %v1047, %v1241
  %v1304 = vsub.f32 %v1048, %v1243
  %v1305 = vsub.f32 %v1049, %v1245
  %v1306 = vsub.f32 %v1050, %v1247
  %v1307 = vsub.f32 %v1051, %v1249
  %v1308 = vsub.f32 %v1052, %v1251
  %v1309 = vsub.f32 %v1053, %v1253
  %v1310 = vsub.f32 %v1054, %v1255
  %v1311 = vsub.f32 %v1055, %v1257
  %v1312 = vsub.f32 %v1056, %v1259
  %v1313 = vsub.f32 %v1057, %v1261
  %v1314 = vsub.f32 %v1058, %v1263
  %v1315 = vsub.f32 %v1059, %v1265
  %v1316 = vsub.f32 %v1060, %v1267
  %v1317 = vsub.f32 %v1061, %v1269
  %v1318 = vsub.f32 %v1062, %v1271
  %v1319 = vsub.f32 %v1063, %v1273
  %v1320 = vsub.f32 %v1064, %v1275
  %v1321 = vsub.f32 %v1065, %v1277
  %v1322 = vsub.f32 %v1066, %v1279
  %v1323 = vsub.f32 %v1067, %v1281
  %v1324 = vsub.f32 %v1068, %v1283
  %v1325 = vsub.f32 %v1069, %v1285
  %v1326 = vsub.f32 %v1070, %v1287
  %v1327 = vsub.f32 %v1071, %v1289
  %v1328 = vsub.f32 %v1072, %v1291
  %v1329 = vsub.f32 %v1073, %v1293
  %v1330 = vsub.f32 %v1074, %v1295
  %v1331 = vsub.f32 %v1075, %v1297
  %v1332 = vsub.f32 %v1076, %v1299
  %v1333 = vsub.f32 %v1077, %v1301
  %1334 = vst.msk [vmem:[%s7] sm:$0xff] %vm949, %v1302
  %1335 = vst.msk [vmem:[%s7 + $0x8] sm:$0xff] %vm949, %v1303
  %1336 = vst.msk [vmem:[%s7 + $0x10] sm:$0xff] %vm949, %v1304
  %1337 = vst.msk [vmem:[%s7 + $0x18] sm:$0xff] %vm949, %v1305
  %1338 = vst.msk [vmem:[%s7 + $0x20] sm:$0xff] %vm949, %v1306
  %1339 = vst.msk [vmem:[%s7 + $0x28] sm:$0xff] %vm949, %v1307
  %1340 = vst.msk [vmem:[%s7 + $0x30] sm:$0xff] %vm949, %v1308
  %1341 = vst.msk [vmem:[%s7 + $0x38] sm:$0xff] %vm949, %v1309
  %1342 = vst.msk [vmem:[%s7 + $0x40] sm:$0xff] %vm949, %v1310
  %1343 = vst.msk [vmem:[%s7 + $0x48] sm:$0xff] %vm949, %v1311
  %1344 = vst.msk [vmem:[%s7 + $0x50] sm:$0xff] %vm949, %v1312
  %1345 = vst.msk [vmem:[%s7 + $0x58] sm:$0xff] %vm949, %v1313
  %1346 = vst.msk [vmem:[%s7 + $0x60] sm:$0xff] %vm949, %v1314
  %1347 = vst.msk [vmem:[%s7 + $0x68] sm:$0xff] %vm949, %v1315
  %1348 = vst.msk [vmem:[%s7 + $0x70] sm:$0xff] %vm949, %v1316
  %1349 = vst.msk [vmem:[%s7 + $0x78] sm:$0xff] %vm949, %v1317
  %1350 = vst.msk [vmem:[%s7 + $0x80] sm:$0xff] %vm949, %v1318
  %1351 = vst.msk [vmem:[%s7 + $0x88] sm:$0xff] %vm949, %v1319
  %1352 = vst.msk [vmem:[%s7 + $0x90] sm:$0xff] %vm949, %v1320
  %1353 = vst.msk [vmem:[%s7 + $0x98] sm:$0xff] %vm949, %v1321
  %1354 = vst.msk [vmem:[%s7 + $0xa0] sm:$0xff] %vm949, %v1322
  %1355 = vst.msk [vmem:[%s7 + $0xa8] sm:$0xff] %vm949, %v1323
  %1356 = vst.msk [vmem:[%s7 + $0xb0] sm:$0xff] %vm949, %v1324
  %1357 = vst.msk [vmem:[%s7 + $0xb8] sm:$0xff] %vm949, %v1325
  %1358 = vst.msk [vmem:[%s7 + $0xc0] sm:$0xff] %vm949, %v1326
  %1359 = vst.msk [vmem:[%s7 + $0xc8] sm:$0xff] %vm949, %v1327
  %1360 = vst.msk [vmem:[%s7 + $0xd0] sm:$0xff] %vm949, %v1328
  %1361 = vst.msk [vmem:[%s7 + $0xd8] sm:$0xff] %vm949, %v1329
  %1362 = vst.msk [vmem:[%s7 + $0xe0] sm:$0xff] %vm949, %v1330
  %1363 = vst.msk [vmem:[%s7 + $0xe8] sm:$0xff] %vm949, %v1331
  %1364 = vst.msk [vmem:[%s7 + $0xf0] sm:$0xff] %vm949, %v1332
  %1365 = vst.msk [vmem:[%s7 + $0xf8] sm:$0xff] %vm949, %v1333
  // Predicated region
  $region30: #{tpu_custom_call.1} parent=0 // pred_check
    _
  $region31: #{tpu_custom_call.1} parent=0 // pred_check_branch
    %1367 = sbr.rel (0) target = $region33
  $region32: #{tpu_custom_call.1} parent=0 // pred_region
    _
  $region33: #{tpu_custom_call.1} parent=0 // pred_fallthru
    _
  // Predicated region
  $region34: #{tpu_custom_call.1} parent=0 // pred_check
    _
  $region35: #{tpu_custom_call.1} parent=0 // pred_check_branch
    %1369 = sbr.rel (0) target = $region37
  $region36: #{tpu_custom_call.1} parent=0 // pred_region
    _
  $region37: #{tpu_custom_call.1} parent=0 // pred_fallthru
    _

</llo_original>
